<compile_context>
chip_gen: v7x
topology: tpu7x:2x2x1
jax: 0.10.0
libtpu: 0.0.40
codegen_flags: <defaults>
</compile_context>

<pallas_src>
import jax
import jax.numpy as jnp
from jax.experimental import pallas as pl
from jax.experimental.pallas import tpu as pltpu


# ----------------------------------------------------------------------------
# Fused ChannelAttention kernel
# ----------------------------------------------------------------------------
def _channel_attention_kernel(x_ref, w1_ref, b1_ref, w2_ref, b2_ref, o_ref):
    # x_ref : (1, C, HW)   one batch, channels on sublanes, flat spatial on lanes
    # w1_ref: (Cr, C)      PyTorch Linear(C, Cr).weight
    # b1_ref: (Cr, 1)      PyTorch Linear(C, Cr).bias  (as a column)
    # w2_ref: (C, Cr)      PyTorch Linear(Cr, C).weight
    # b2_ref: (C, 1)       PyTorch Linear(Cr, C).bias  (as a column)
    # o_ref : (1, C, HW)
    xv = x_ref[0]                                             # (C, HW) f32
    hw = xv.shape[1]

    # Global average / max pooling over the spatial (lane) axis.
    avg = jnp.sum(xv, axis=1, keepdims=True) * (1.0 / hw)     # (C, 1)
    mx = jnp.max(xv, axis=1, keepdims=True)                   # (C, 1)

    # Shared MLP applied to both pooled vectors at once (column orientation,
    # so PyTorch (out, in) weights are used directly: y_col = W @ x_col + b).
    p = jnp.concatenate([avg, mx], axis=1)                    # (C, 2)
    h = jnp.dot(w1_ref[...], p,
                preferred_element_type=jnp.float32) + b1_ref[...]   # (Cr, 2)
    h = jnp.maximum(h, 0.0)
    o = jnp.dot(w2_ref[...], h,
                preferred_element_type=jnp.float32) + b2_ref[...]   # (C, 2)

    # MLP(avg) + MLP(max), sigmoid gate, broadcast-multiply over spatial lanes.
    att = jnp.sum(o, axis=1, keepdims=True)                   # (C, 1)
    gate = jax.nn.sigmoid(att)                                # (C, 1)
    o_ref[0] = xv * gate                                      # (C, HW)


def channel_attention(x_nchw, w1, b1, w2, b2):
    """ChannelAttention forward.  x: (N, C, H, W) NCHW (PyTorch layout)."""
    N, C, H, W = x_nchw.shape
    HW = H * W
    Cr = w1.shape[0]                 # reduced channels = C // reduction_ratio

    # Free view: flatten spatial dims so the lane dim is HW (lane-dense).
    x = x_nchw.reshape(N, C, HW).astype(jnp.float32)

    # TODO(synk): for feature maps too large to hold one (C, H*W) slab in VMEM,
    # fall back to a two-pass variant (spatially tiled pooling, then apply).
    out = pl.pallas_call(
        _channel_attention_kernel,
        out_shape=jax.ShapeDtypeStruct((N, C, HW), jnp.float32),
        grid_spec=pltpu.PrefetchScalarGridSpec(
            num_scalar_prefetch=0,
            grid=(N,),
            in_specs=[
                pl.BlockSpec((1, C, HW), lambda n: (n, 0, 0)),
                pl.BlockSpec((Cr, C), lambda n: (0, 0)),
                pl.BlockSpec((Cr, 1), lambda n: (0, 0)),
                pl.BlockSpec((C, Cr), lambda n: (0, 0)),
                pl.BlockSpec((C, 1), lambda n: (0, 0)),
            ],
            out_specs=pl.BlockSpec((1, C, HW), lambda n: (n, 0, 0)),
        ),
        compiler_params=pltpu.CompilerParams(
            dimension_semantics=("parallel",)),
    )(x, w1, b1.reshape(Cr, 1), w2, b2.reshape(C, 1))

    return out.reshape(N, C, H, W)


# ----------------------------------------------------------------------------
# Pure-JAX reference (mirrors the PyTorch module exactly)
# ----------------------------------------------------------------------------
def _reference(x, w1, b1, w2, b2):
    avg = x.mean(axis=(2, 3))                                 # (N, C)
    mx = x.max(axis=(2, 3))                                   # (N, C)

    def mlp(v):                                               # v: (N, C)
        h = jnp.maximum(v @ w1.T + b1, 0.0)
        return h @ w2.T + b2

    out = mlp(avg) + mlp(mx)                                  # (N, C)
    gate = jax.nn.sigmoid(out)[:, :, None, None]
    return x * gate


if __name__ == "__main__":
    # Small shapes consistent with the module: batch=2, channels=32 (r=4 -> 8
    # hidden), 16x16 spatial (so H*W = 256 is lane-dense).
    N, C, H, W = 2, 32, 16, 16
    reduction_ratio = 4
    Cr = C // reduction_ratio

    key = jax.random.PRNGKey(0)
    k = jax.random.split(key, 5)
    x = jax.random.normal(k[0], (N, C, H, W), jnp.float32)

    # Deterministic synthetic parameters in PyTorch Linear layout:
    #   Linear(C, Cr): weight (Cr, C), bias (Cr,)
    #   Linear(Cr, C): weight (C, Cr), bias (C,)
    w1 = jax.random.normal(k[1], (Cr, C), jnp.float32) * 0.2
    b1 = jax.random.normal(k[2], (Cr,), jnp.float32) * 0.1
    w2 = jax.random.normal(k[3], (C, Cr), jnp.float32) * 0.2
    b2 = jax.random.normal(k[4], (C,), jnp.float32) * 0.1

    out = channel_attention(x, w1, b1, w2, b2)
    out = jax.block_until_ready(out)
    assert out.shape == (N, C, H, W)

    ref = _reference(x, w1, b1, w2, b2)
    err = float(jnp.max(jnp.abs(out - ref)))
    assert err < 1e-4, f"max abs err {err}"

    print("KERNEL_OK")
</pallas_src>

<mosaic_0001>
module attributes {stable_mosaic.version = 11 : i64} {
  func.func @_channel_attention_kernel(%arg0: i32, %arg1: memref<1x32x256xf32, #tpu.memory_space<vmem>>, %arg2: memref<8x32xf32, #tpu.memory_space<vmem>>, %arg3: memref<8x1xf32, #tpu.memory_space<vmem>>, %arg4: memref<32x8xf32, #tpu.memory_space<vmem>>, %arg5: memref<32x1xf32, #tpu.memory_space<vmem>>, %arg6: memref<1x32x256xf32, #tpu.memory_space<vmem>>) attributes {dimension_semantics = [#tpu.dimension_semantics<parallel>], iteration_bounds = array<i64: 2>, scalar_prefetch = 0 : i64, scratch_operands = 0 : i64, tpu.core_type = #tpu.core_type<tc>, window_params = [{transform_indices = @transform_0, window_bounds = array<i64: 1, 32, 256>}, {pipeline_mode = #tpu.pipeline_mode<synchronous>, transform_indices = @transform_1, window_bounds = array<i64: 8, 32>}, {pipeline_mode = #tpu.pipeline_mode<synchronous>, transform_indices = @transform_2, window_bounds = array<i64: 8, 1>}, {pipeline_mode = #tpu.pipeline_mode<synchronous>, transform_indices = @transform_3, window_bounds = array<i64: 32, 8>}, {pipeline_mode = #tpu.pipeline_mode<synchronous>, transform_indices = @transform_4, window_bounds = array<i64: 32, 1>}, {transform_indices = @transform_5, window_bounds = array<i64: 1, 32, 256>}]} {
    %c0 = arith.constant 0 : index
    %c0_0 = arith.constant 0 : index
    %c0_1 = arith.constant 0 : index
    %0 = vector.load %arg1[%c0, %c0_0, %c0_1] : memref<1x32x256xf32, #tpu.memory_space<vmem>>, vector<1x32x256xf32>
    %1 = vector.shape_cast %0 : vector<1x32x256xf32> to vector<32x256xf32>
    %cst = arith.constant dense<0.000000e+00> : vector<32xf32>
    %2 = vector.multi_reduction <add>, %1, %cst [1] : vector<32x256xf32> to vector<32xf32>
    %3 = vector.shape_cast %2 : vector<32xf32> to vector<32x1xf32>
    %cst_2 = arith.constant 3.906250e-03 : f32
    %4 = vector.broadcast %cst_2 : f32 to vector<32x1xf32>
    %5 = arith.mulf %3, %4 : vector<32x1xf32>
    %cst_3 = arith.constant dense<0xFF800000> : vector<32xf32>
    %6 = vector.multi_reduction <maximumf>, %1, %cst_3 [1] : vector<32x256xf32> to vector<32xf32>
    %7 = vector.shape_cast %6 : vector<32xf32> to vector<32x1xf32>
    %8 = tpu.concatenate %5, %7 in 1 : vector<32x1xf32>, vector<32x1xf32> -> vector<32x2xf32>
    %c0_4 = arith.constant 0 : index
    %c0_5 = arith.constant 0 : index
    %9 = vector.load %arg2[%c0_4, %c0_5] : memref<8x32xf32, #tpu.memory_space<vmem>>, vector<8x32xf32>
    %cst_6 = arith.constant dense<0.000000e+00> : vector<8x2xf32>
    %10 = tpu.matmul %9, %8, %cst_6 {dimension_numbers = #tpu.dot_dimension_numbers<[1], [0], [0], [1], [0, 0, 1, 1], [], []>} : vector<8x32xf32>, vector<32x2xf32>, vector<8x2xf32> -> vector<8x2xf32>
    %c0_7 = arith.constant 0 : index
    %c0_8 = arith.constant 0 : index
    %11 = vector.load %arg3[%c0_7, %c0_8] : memref<8x1xf32, #tpu.memory_space<vmem>>, vector<8x1xf32>
    %12 = vector.broadcast %11 : vector<8x1xf32> to vector<8x2xf32>
    %13 = arith.addf %10, %12 : vector<8x2xf32>
    %cst_9 = arith.constant 0.000000e+00 : f32
    %14 = vector.broadcast %cst_9 : f32 to vector<8x2xf32>
    %15 = arith.maximumf %13, %14 : vector<8x2xf32>
    %c0_10 = arith.constant 0 : index
    %c0_11 = arith.constant 0 : index
    %16 = vector.load %arg4[%c0_10, %c0_11] : memref<32x8xf32, #tpu.memory_space<vmem>>, vector<32x8xf32>
    %cst_12 = arith.constant dense<0.000000e+00> : vector<32x2xf32>
    %17 = tpu.matmul %16, %15, %cst_12 {dimension_numbers = #tpu.dot_dimension_numbers<[1], [0], [0], [1], [0, 0, 1, 1], [], []>} : vector<32x8xf32>, vector<8x2xf32>, vector<32x2xf32> -> vector<32x2xf32>
    %c0_13 = arith.constant 0 : index
    %c0_14 = arith.constant 0 : index
    %18 = vector.load %arg5[%c0_13, %c0_14] : memref<32x1xf32, #tpu.memory_space<vmem>>, vector<32x1xf32>
    %19 = vector.broadcast %18 : vector<32x1xf32> to vector<32x2xf32>
    %20 = arith.addf %17, %19 : vector<32x2xf32>
    %cst_15 = arith.constant dense<0.000000e+00> : vector<32xf32>
    %21 = vector.multi_reduction <add>, %20, %cst_15 [1] : vector<32x2xf32> to vector<32xf32>
    %22 = vector.shape_cast %21 : vector<32xf32> to vector<32x1xf32>
    %23 = arith.negf %22 : vector<32x1xf32>
    %24 = math.exp %23 : vector<32x1xf32>
    %cst_16 = arith.constant 1.000000e+00 : f32
    %25 = vector.broadcast %cst_16 : f32 to vector<32x1xf32>
    %26 = arith.addf %25, %24 : vector<32x1xf32>
    %27 = arith.divf %25, %26 : vector<32x1xf32>
    %28 = vector.broadcast %27 : vector<32x1xf32> to vector<32x256xf32>
    %29 = arith.mulf %1, %28 : vector<32x256xf32>
    %c0_17 = arith.constant 0 : index
    %c0_18 = arith.constant 0 : index
    %c0_19 = arith.constant 0 : index
    %30 = vector.load %arg6[%c0_17, %c0_18, %c0_19] : memref<1x32x256xf32, #tpu.memory_space<vmem>>, vector<1x32x256xf32>
    %31 = vector.shape_cast %30 : vector<1x32x256xf32> to vector<32x256xf32>
    %32 = vector.shape_cast %29 : vector<32x256xf32> to vector<1x32x256xf32>
    tpu.vector_store %arg6[%c0_17, %c0_18, %c0_19], %32 {strides = array<i32>} : memref<1x32x256xf32, #tpu.memory_space<vmem>>, vector<1x32x256xf32>,
    return
  }
  func.func @transform_0(%arg0: i32) -> (i32, i32, i32) {
    %c0_i32 = arith.constant 0 : i32
    %c0_i32_0 = arith.constant 0 : i32
    %c0_i32_1 = arith.constant 0 : i32
    return %arg0, %c0_i32, %c0_i32_0 : i32, i32, i32
  }
  func.func @transform_1(%arg0: i32) -> (i32, i32) {
    %c0_i32 = arith.constant 0 : i32
    %c0_i32_0 = arith.constant 0 : i32
    %c0_i32_1 = arith.constant 0 : i32
    return %c0_i32, %c0_i32_0 : i32, i32
  }
  func.func @transform_2(%arg0: i32) -> (i32, i32) {
    %c0_i32 = arith.constant 0 : i32
    %c0_i32_0 = arith.constant 0 : i32
    %c0_i32_1 = arith.constant 0 : i32
    return %c0_i32, %c0_i32_0 : i32, i32
  }
  func.func @transform_3(%arg0: i32) -> (i32, i32) {
    %c0_i32 = arith.constant 0 : i32
    %c0_i32_0 = arith.constant 0 : i32
    %c0_i32_1 = arith.constant 0 : i32
    return %c0_i32, %c0_i32_0 : i32, i32
  }
  func.func @transform_4(%arg0: i32) -> (i32, i32) {
    %c0_i32 = arith.constant 0 : i32
    %c0_i32_0 = arith.constant 0 : i32
    %c0_i32_1 = arith.constant 0 : i32
    return %c0_i32, %c0_i32_0 : i32, i32
  }
  func.func @transform_5(%arg0: i32) -> (i32, i32, i32) {
    %c0_i32 = arith.constant 0 : i32
    %c0_i32_0 = arith.constant 0 : i32
    %c0_i32_1 = arith.constant 0 : i32
    return %arg0, %c0_i32, %c0_i32_0 : i32, i32, i32
  }
}

</mosaic_0001>

<llo_original>
// kernel: tpu_custom_call.1
$region0: #{tpu_custom_call.1}
  #allocation0 [shape = 'u32[]', space=smem, size = 0x4, offset = 0x4, fixed_abs, tag = 'smem constant byte address 0x4 - core index']
  #allocation1 [shape = 'u32[144,128]{1,0:T(1,128)}', space=vmem, size = 0x12000, scoped, tag = 'internal scratch']
  %s0 = inlined_call_operand.hbm [shape: f32[2,32,256], index: 0, kind: input, shape index: {}]
  %s1 = inlined_call_operand.vmem [shape: f32[8,32], index: 1, kind: input, shape index: {}]
  %s2 = inlined_call_operand.vmem [shape: f32[8,1], index: 2, kind: input, shape index: {}]
  %s3 = inlined_call_operand.vmem [shape: f32[32,8], index: 3, kind: input, shape index: {}]
  %s4 = inlined_call_operand.vmem [shape: f32[32,1], index: 4, kind: input, shape index: {}]
  %s5 = inlined_call_operand.hbm [shape: f32[2,32,256], index: 5, kind: output, shape index: {}]
  %s6 = sld [smem:[#allocation0]]
  $region57: #{tpu_custom_call.1} parent=0
    _
  %s8 = ssub.s32 1, %s6
  %s9 = scalar_select 0, %s8, %s6
  $region1: #{tpu_custom_call.1} parent=0
    #allocation2 [shape = 'u8[65536]{0}', space=vmem, size = 0x10000, scoped, tag = 'input window, operand 0']
    #allocation3 [shape = 's32[2]{0}', space=sflag, size = 0x8, scoped, tag = 'scoped memory for tpu_custom_call.1']
    #allocation4 [shape = 's32[2]{0}', space=sflag, size = 0x8, scoped, tag = 'scoped memory for tpu_custom_call.1']
    #allocation5 [shape = 'u8[65536]{0}', space=vmem, size = 0x10000, scoped, tag = 'output window, operand 0']
    %10 = vsyncpa [#allocation3], 0
    %s11 = scalar_lea.sflag [#allocation3], 1
    %12 = vsyncpa %s11, 0
    %13 = vsyncpa [#allocation4], 0
    %s14 = scalar_lea.sflag [#allocation4], 1
    %15 = vsyncpa %s14, 0
    loop: start=0, step=1, limit=4
    $region2: #{tpu_custom_call.1} parent=1 // loop_pre_header
      _
    $region3: #{tpu_custom_call.1} parent=1 // loop_header
      %s17 = sphi 0, %s21
      %p18 = scmp.ge.s32.totalorder %s17, 4
      %s27 = sphi 0, %s29
      %s30 = sphi 0, %s27
      %s31 = sphi 0, %s30
      %s47 = sphi 0, %s31
      %s51 = sphi 0, %s51
      %s53 = sphi 0, %s51
      %s54 = sphi 0, %s53
      %s68 = sphi 0, %s54
      %s72 = sphi 0, %s72
      %s74 = sphi 0, %s72
      %s75 = sphi 0, %s74
      %s89 = sphi 0, %s75
      %s93 = sphi 0, %s93
      %s95 = sphi 0, %s93
      %s96 = sphi 0, %s95
      %s110 = sphi 0, %s96
      %s114 = sphi 0, %s114
      %s116 = sphi 0, %s114
      %s117 = sphi 0, %s116
      %s131 = sphi 0, %s117
      %s137 = sphi 0, %s139
      %s140 = sphi 0, %s137
      %s141 = sphi 0, %s140
      %s157 = sphi 0, %s141
    $region4: #{tpu_custom_call.1} parent=1 // loop_header_branch
      %20 = sbr.rel (%p18) target = $region8
    $region5: #{tpu_custom_call.1} parent=1 // loop_body
      %s22 = ssub.s32 %s17, 1
      %s23 = ssub.s32 %s17, 2
      %s24 = sadd.s32 %s17, 1
      %s25 = ssub.s32 %s17, %s24
      %p26 = scmp.eq.s32.totalorder %s25, 0
      %s28 = sadd.s32 %s27, 1
      %s29 = scalar_select %p26, %s27, %s28
      %p32 = pneg %p26
      %p33 = scmp.eq.s32.totalorder %s17, 1
      %p34 = por %p32, %p33
      %p35 = scmp.ne.s32.totalorder %s27, %s30
      %p36 = scmp.eq.s32.totalorder %s17, 0
      %p37 = por %p35, %p36
      %p38 = scmp.ne.s32.totalorder %s27, %s30
      %p39 = scmp.eq.s32.totalorder %s22, 1
      %p40 = por %p38, %p39
      %p41 = scmp.ne.s32.totalorder %s30, %s31
      %p42 = scmp.eq.s32.totalorder %s22, 0
      %p43 = por %p41, %p42
      %p44 = scmp.ne.s32.totalorder %s30, %s31
      %p45 = scmp.eq.s32.totalorder %s23, 1
      %p46 = por %p44, %p45
      %p48 = scmp.ne.s32.totalorder %s31, %s47
      %p49 = scmp.eq.s32.totalorder %s23, 0
      %p50 = por %p48, %p49
      %s52 = sadd.s32 %s51, 1
      %p55 = scmp.eq.s32.totalorder %s17, 1
      %p56 = scmp.ne.s32.totalorder %s51, %s53
      %p57 = scmp.eq.s32.totalorder %s17, 0
      %p58 = por %p56, %p57
      %p59 = scmp.ne.s32.totalorder %s51, %s53
      %p60 = scmp.eq.s32.totalorder %s22, 1
      %p61 = por %p59, %p60
      %p62 = scmp.ne.s32.totalorder %s53, %s54
      %p63 = scmp.eq.s32.totalorder %s22, 0
      %p64 = por %p62, %p63
      %p65 = scmp.ne.s32.totalorder %s53, %s54
      %p66 = scmp.eq.s32.totalorder %s23, 1
      %p67 = por %p65, %p66
      %p69 = scmp.ne.s32.totalorder %s54, %s68
      %p70 = scmp.eq.s32.totalorder %s23, 0
      %p71 = por %p69, %p70
      %s73 = sadd.s32 %s72, 1
      %p76 = scmp.eq.s32.totalorder %s17, 1
      %p77 = scmp.ne.s32.totalorder %s72, %s74
      %p78 = scmp.eq.s32.totalorder %s17, 0
      %p79 = por %p77, %p78
      %p80 = scmp.ne.s32.totalorder %s72, %s74
      %p81 = scmp.eq.s32.totalorder %s22, 1
      %p82 = por %p80, %p81
      %p83 = scmp.ne.s32.totalorder %s74, %s75
      %p84 = scmp.eq.s32.totalorder %s22, 0
      %p85 = por %p83, %p84
      %p86 = scmp.ne.s32.totalorder %s74, %s75
      %p87 = scmp.eq.s32.totalorder %s23, 1
      %p88 = por %p86, %p87
      %p90 = scmp.ne.s32.totalorder %s75, %s89
      %p91 = scmp.eq.s32.totalorder %s23, 0
      %p92 = por %p90, %p91
      %s94 = sadd.s32 %s93, 1
      %p97 = scmp.eq.s32.totalorder %s17, 1
      %p98 = scmp.ne.s32.totalorder %s93, %s95
      %p99 = scmp.eq.s32.totalorder %s17, 0
      %p100 = por %p98, %p99
      %p101 = scmp.ne.s32.totalorder %s93, %s95
      %p102 = scmp.eq.s32.totalorder %s22, 1
      %p103 = por %p101, %p102
      %p104 = scmp.ne.s32.totalorder %s95, %s96
      %p105 = scmp.eq.s32.totalorder %s22, 0
      %p106 = por %p104, %p105
      %p107 = scmp.ne.s32.totalorder %s95, %s96
      %p108 = scmp.eq.s32.totalorder %s23, 1
      %p109 = por %p107, %p108
      %p111 = scmp.ne.s32.totalorder %s96, %s110
      %p112 = scmp.eq.s32.totalorder %s23, 0
      %p113 = por %p111, %p112
      %s115 = sadd.s32 %s114, 1
      %p118 = scmp.eq.s32.totalorder %s17, 1
      %p119 = scmp.ne.s32.totalorder %s114, %s116
      %p120 = scmp.eq.s32.totalorder %s17, 0
      %p121 = por %p119, %p120
      %p122 = scmp.ne.s32.totalorder %s114, %s116
      %p123 = scmp.eq.s32.totalorder %s22, 1
      %p124 = por %p122, %p123
      %p125 = scmp.ne.s32.totalorder %s116, %s117
      %p126 = scmp.eq.s32.totalorder %s22, 0
      %p127 = por %p125, %p126
      %p128 = scmp.ne.s32.totalorder %s116, %s117
      %p129 = scmp.eq.s32.totalorder %s23, 1
      %p130 = por %p128, %p129
      %p132 = scmp.ne.s32.totalorder %s117, %s131
      %p133 = scmp.eq.s32.totalorder %s23, 0
      %p134 = por %p132, %p133
      %s135 = ssub.s32 %s17, %s24
      %p136 = scmp.eq.s32.totalorder %s135, 0
      %s138 = sadd.s32 %s137, 1
      %s139 = scalar_select %p136, %s137, %s138
      %p142 = pneg %p136
      %p143 = scmp.eq.s32.totalorder %s17, 1
      %p144 = por %p142, %p143
      %p145 = scmp.ne.s32.totalorder %s137, %s140
      %p146 = scmp.eq.s32.totalorder %s17, 0
      %p147 = por %p145, %p146
      %p148 = scmp.ne.s32.totalorder %s137, %s140
      %p149 = scmp.eq.s32.totalorder %s22, 1
      %p150 = por %p148, %p149
      %p151 = scmp.ne.s32.totalorder %s140, %s141
      %p152 = scmp.eq.s32.totalorder %s22, 0
      %p153 = por %p151, %p152
      %p154 = scmp.ne.s32.totalorder %s140, %s141
      %p155 = scmp.eq.s32.totalorder %s23, 1
      %p156 = por %p154, %p155
      %p158 = scmp.ne.s32.totalorder %s141, %s157
      %p159 = scmp.eq.s32.totalorder %s23, 0
      %p160 = por %p158, %p159
      %p161 = scmp.le.s32.totalorder 1, %s17
      %p162 = scmp.lt.s32.totalorder %s17, 3
      %p163 = pnand %p161, %p162
      %p164 = pneg %p163
      // Predicated region
      $region9: #{tpu_custom_call.1} parent=5 // pred_check
        _
      $region10: #{tpu_custom_call.1} parent=5 // pred_check_branch
        %166 = sbr.rel (%p163) target = $region12
      $region11: #{tpu_custom_call.1} parent=5 // pred_region
        %s167 = ssub.s32 %s17, 1
        // Predicated region
        $region13: #{tpu_custom_call.1} parent=11 // pred_check
          %p168 = pneg %p64
        $region14: #{tpu_custom_call.1} parent=11 // pred_check_branch
          %170 = sbr.rel (%p168) target = $region16
        $region15: #{tpu_custom_call.1} parent=11 // pred_region
          _
        $region16: #{tpu_custom_call.1} parent=11 // pred_fallthru
          _
        // Predicated region
        $region17: #{tpu_custom_call.1} parent=11 // pred_check
          %p171 = pneg %p85
        $region18: #{tpu_custom_call.1} parent=11 // pred_check_branch
          %173 = sbr.rel (%p171) target = $region20
        $region19: #{tpu_custom_call.1} parent=11 // pred_region
          _
        $region20: #{tpu_custom_call.1} parent=11 // pred_fallthru
          _
        // Predicated region
        $region21: #{tpu_custom_call.1} parent=11 // pred_check
          %p174 = pneg %p106
        $region22: #{tpu_custom_call.1} parent=11 // pred_check_branch
          %176 = sbr.rel (%p174) target = $region24
        $region23: #{tpu_custom_call.1} parent=11 // pred_region
          _
        $region24: #{tpu_custom_call.1} parent=11 // pred_fallthru
          _
        // Predicated region
        $region25: #{tpu_custom_call.1} parent=11 // pred_check
          %p177 = pneg %p127
        $region26: #{tpu_custom_call.1} parent=11 // pred_check_branch
          %179 = sbr.rel (%p177) target = $region28
        $region27: #{tpu_custom_call.1} parent=11 // pred_region
          _
        $region28: #{tpu_custom_call.1} parent=11 // pred_fallthru
          _
      $region12: #{tpu_custom_call.1} parent=5 // pred_fallthru
        _
      %p180 = scmp.lt.s32.totalorder %s17, 2
      // Predicated region
      $region29: #{tpu_custom_call.1} parent=5 // pred_check
        %p181 = pneg %p180
      $region30: #{tpu_custom_call.1} parent=5 // pred_check_branch
        %183 = sbr.rel (%p181) target = $region32
      $region31: #{tpu_custom_call.1} parent=5 // pred_region
        // Predicated region
        $region33: #{tpu_custom_call.1} parent=31 // pred_check
          %p184 = pneg %p37
        $region34: #{tpu_custom_call.1} parent=31 // pred_check_branch
          %186 = sbr.rel (%p184) target = $region36
        $region35: #{tpu_custom_call.1} parent=31 // pred_region
          %s187 = sand.u32 %s27, 1
          %s188 = scalar_lea.sflag [#allocation3], %s187
          %s189 = sand.u32 %s27, 1
          %s190 = smul.addr %s189, 64
          %s191 = scalar_lea.vmem [#allocation2], %s190
          %s193 = ssub.s32 1024, 1024
          %194 = vsyncadd %s188, %s193
          %s195 = smul.addr %s17, 8
          %s196 = smul.addr %s195, 128
          %s197 = scalar_lea.hbm %s0, %s196
          %s198 = sshll.u32 %s191, 4
          %s199 = int_to_ptr.vmem [resolvable:$true] %s198
          %204 = dma.hbm_to_vmem [thread:$0]  %s197, 1024, %s199, %s188, 256, 256, 16
        $region36: #{tpu_custom_call.1} parent=31 // pred_fallthru
          _
      $region32: #{tpu_custom_call.1} parent=5 // pred_fallthru
        _
      %p205 = scmp.le.s32.totalorder 1, %s17
      %p206 = scmp.lt.s32.totalorder %s17, 3
      %p207 = pnand %p205, %p206
      %p208 = pneg %p207
      // Predicated region
      $region37: #{tpu_custom_call.1} parent=5 // pred_check
        _
      $region38: #{tpu_custom_call.1} parent=5 // pred_check_branch
        %210 = sbr.rel (%p207) target = $region40
      $region39: #{tpu_custom_call.1} parent=5 // pred_region
        %s211 = ssub.s32 %s17, 1
        %s212 = sand.u32 %s30, 1
        %s213 = scalar_lea.sflag [#allocation3], %s212
        %s214 = sand.u32 %s30, 1
        %s215 = smul.addr %s214, 64
        %s216 = scalar_lea.vmem [#allocation2], %s215
        // Predicated region
        $region41: #{tpu_custom_call.1} parent=39 // pred_check
          %p217 = pneg %p43
        $region42: #{tpu_custom_call.1} parent=39 // pred_check_branch
          %219 = sbr.rel (%p217) target = $region44
        $region43: #{tpu_custom_call.1} parent=39 // pred_region
          %220 = dma.done %s213, 1024
        $region44: #{tpu_custom_call.1} parent=39 // pred_fallthru
          _
        %s221 = sand.u32 %s30, 1
        %s222 = scalar_lea.sflag [#allocation3], %s221
        %s223 = sand.u32 %s30, 1
        %s224 = smul.addr %s223, 64
        %s225 = scalar_lea.vmem [#allocation2], %s224
        %p226 = pneg %p43
        %p227 = pneg %p40
        %p228 = pneg %p64
        %p229 = pneg %p61
        %p230 = pneg %p85
        %p231 = pneg %p82
        %p232 = pneg %p106
        %p233 = pneg %p103
        %p234 = pneg %p127
        %p235 = pneg %p124
        %p236 = pneg %p153
        %p237 = pneg %p150
        %s238 = sand.u32 %s140, 1
        %s239 = scalar_lea.sflag [#allocation4], %s238
        %s240 = sand.u32 %s140, 1
        %s241 = smul.addr %s240, 64
        %s242 = scalar_lea.vmem [#allocation5], %s241
        %v243 = vld [vmem:[%s216] sm:$0xff]
        %v244 = vld [vmem:[%s216 + $0x8] sm:$0xff]
        %v245 = vld [vmem:[%s216 + $0x10] sm:$0xff]
        %v246 = vld [vmem:[%s216 + $0x18] sm:$0xff]
        %v247 = vld [vmem:[%s216 + $0x20] sm:$0xff]
        %v248 = vld [vmem:[%s216 + $0x28] sm:$0xff]
        %v249 = vld [vmem:[%s216 + $0x30] sm:$0xff]
        %v250 = vld [vmem:[%s216 + $0x38] sm:$0xff]
        %v251 = vadd.f32 %v243, %v244
        %252 = vadd.xlane.f32.xlu0 %v251
        %v253 = vpop.xlane.xlu0 %252
        %v254 = vadd.f32 %v245, %v246
        %255 = vadd.xlane.f32.xlu0 %v254
        %v256 = vpop.xlane.xlu0 %255
        %v257 = vadd.f32 %v247, %v248
        %258 = vadd.xlane.f32.xlu0 %v257
        %v259 = vpop.xlane.xlu0 %258
        %v260 = vadd.f32 %v249, %v250
        %261 = vadd.xlane.f32.xlu0 %v260
        %v262 = vpop.xlane.xlu0 %261
        %v263 = vmul.f32 %v253, 0.00390625
        %v264 = vmul.f32 %v256, 0.00390625
        %v265 = vmul.f32 %v259, 0.00390625
        %v266 = vmul.f32 %v262, 0.00390625
        %v267 = vmax.f32 %v243, %v244
        %268 = vmax.xlane.f32.xlu0 %v267
        %v269 = vpop.xlane.xlu0 %268
        %v270 = vmax.f32 %v245, %v246
        %271 = vmax.xlane.f32.xlu0 %v270
        %v272 = vpop.xlane.xlu0 %271
        %v273 = vmax.f32 %v247, %v248
        %274 = vmax.xlane.f32.xlu0 %v273
        %v275 = vpop.xlane.xlu0 %274
        %v276 = vmax.f32 %v249, %v250
        %277 = vmax.xlane.f32.xlu0 %v276
        %v278 = vpop.xlane.xlu0 %277
        %vm279 = vcmask 7168
        %v280 = vsel %vm279, %v263, %v269
        %v281 = vsel %vm279, %v264, %v272
        %v282 = vsel %vm279, %v265, %v275
        %v283 = vsel %vm279, %v266, %v278
        %v284 = vld [vmem:[%s1] sm:$0xff]
        %v285 = vld [vmem:[%s2] sm:$0xff]
        %287 = vset.pattern.permute.xlu0 0
        %288 = vperm.xlu0 %287, %v285
        %v289 = vpop.permute.xlu0 %288
        %vm291 = vcmask 261120
        %v293 = vsel %vm291, %v284, 0
        %295 = vmatprep.subr.mxu0 0.0
        %296 = vmatpush1.msra.mxu0 %v280
        %297 = vmatprep.subr.mxu0 0.0
        %298 = vmatpush1.msra.mxu0 %v281
        %299 = vmatprep.subr.mxu0 0.0
        %300 = vmatpush1.msra.mxu0 %v282
        %301 = vmatprep.subr.mxu0 0.0
        %302 = vmatpush1.msra.mxu0 %v283
        %303 = vmatprep.subr.mxu0 0.0
        %304 = vmatpush1.msra.mxu0 0.0
        %305 = vmatprep.subr.mxu0 0.0
        %306 = vmatpush1.msra.mxu0 0.0
        %307 = vmatprep.subr.mxu0 0.0
        %308 = vmatpush1.msra.mxu0 0.0
        %309 = vmatprep.subr.mxu0 0.0
        %310 = vmatpush1.msra.mxu0 0.0
        %311 = vmatprep.subr.mxu0 0.0
        %312 = vmatpush1.msra.mxu0 0.0
        %313 = vmatprep.subr.mxu0 0.0
        %314 = vmatpush1.msra.mxu0 0.0
        %315 = vmatprep.subr.mxu0 0.0
        %316 = vmatpush1.msra.mxu0 0.0
        %317 = vmatprep.subr.mxu0 0.0
        %318 = vmatpush1.msra.mxu0 0.0
        %319 = vmatprep.subr.mxu0 0.0
        %320 = vmatpush1.msra.mxu0 0.0
        %321 = vmatprep.subr.mxu0 0.0
        %322 = vmatpush1.msra.mxu0 0.0
        %323 = vmatprep.subr.mxu0 0.0
        %324 = vmatpush1.msra.mxu0 0.0
        %325 = vmatprep.subr.mxu0 0.0
        %326 = vmatpush1.msra.mxu0 0.0
        %327 = vmatprep.subr.mxu0 0.0
        %328 = vmatpush1.msra.mxu0 0.0
        %329 = vmatprep.subr.mxu0 0.0
        %330 = vmatpush1.msra.mxu0 0.0
        %331 = vmatprep.subr.mxu0 0.0
        %332 = vmatpush1.msra.mxu0 0.0
        %333 = vmatprep.subr.mxu0 0.0
        %334 = vmatpush1.msra.mxu0 0.0
        %335 = vmatprep.subr.mxu0 0.0
        %336 = vmatpush1.msra.mxu0 0.0
        %337 = vmatprep.subr.mxu0 0.0
        %338 = vmatpush1.msra.mxu0 0.0
        %339 = vmatprep.subr.mxu0 0.0
        %340 = vmatpush1.msra.mxu0 0.0
        %341 = vmatprep.subr.mxu0 0.0
        %342 = vmatpush1.msra.mxu0 0.0
        %343 = vmatprep.subr.mxu0 0.0
        %344 = vmatpush1.msra.mxu0 0.0
        %345 = vmatprep.subr.mxu0 0.0
        %346 = vmatpush1.msra.mxu0 0.0
        %347 = vmatprep.subr.mxu0 0.0
        %348 = vmatpush1.msra.mxu0 0.0
        %349 = vmatprep.subr.mxu0 0.0
        %350 = vmatpush1.msra.mxu0 0.0
        %351 = vmatprep.subr.mxu0 0.0
        %352 = vmatpush1.msra.mxu0 0.0
        %353 = vmatprep.subr.mxu0 0.0
        %354 = vmatpush1.msra.mxu0 0.0
        %355 = vmatprep.subr.mxu0 0.0
        %356 = vmatpush1.msra.mxu0 0.0
        %357 = vmatprep.subr.mxu0 0.0
        %358 = vmatpush1.msra.mxu0 0.0
        %359 = vmatprep.mubr.f32.mxu0 0.0
        %360 = vmatmul.mubr.f32.gmra.mrb[0].mxu0 %v293
        %v361 = vpop.f32.mrb[0].mxu0
        %v362 = vadd.f32 %v289, %v361
        %v363 = vpop.f32.mrb[0].mxu0
        %364 = vdwg.mxu0
        %v365 = vmax.f32 %v362, 0.0
        %v366 = vld [vmem:[%s3] sm:$0xff]
        %v367 = vld [vmem:[%s3 + $0x8] sm:$0xff]
        %v368 = vld [vmem:[%s3 + $0x10] sm:$0xff]
        %v369 = vld [vmem:[%s3 + $0x18] sm:$0xff]
        %v370 = vld [vmem:[%s4] sm:$0xff]
        %v371 = vld [vmem:[%s4 + $0x8] sm:$0xff]
        %v372 = vld [vmem:[%s4 + $0x10] sm:$0xff]
        %v373 = vld [vmem:[%s4 + $0x18] sm:$0xff]
        %375 = vset.pattern.permute.xlu0 0
        %376 = vperm.xlu0 %375, %v370
        %v377 = vpop.permute.xlu0 %376
        %380 = vset.pattern.permute.xlu0 0
        %381 = vperm.xlu0 %380, %v371
        %v382 = vpop.permute.xlu0 %381
        %385 = vset.pattern.permute.xlu0 0
        %386 = vperm.xlu0 %385, %v372
        %v387 = vpop.permute.xlu0 %386
        %390 = vset.pattern.permute.xlu0 0
        %391 = vperm.xlu0 %390, %v373
        %v392 = vpop.permute.xlu0 %391
        %vm394 = vcmask 64512
        %v396 = vsel %vm394, %v366, 0
        %v399 = vsel %vm394, %v367, 0
        %v402 = vsel %vm394, %v368, 0
        %v405 = vsel %vm394, %v369, 0
        %407 = vmatprep.subr.mxu0 0.0
        %408 = vmatpush1.msra.mxu0 %v365
        %409 = vmatprep.subr.mxu0 0.0
        %410 = vmatpush1.msra.mxu0 0.0
        %411 = vmatprep.subr.mxu0 0.0
        %412 = vmatpush1.msra.mxu0 0.0
        %413 = vmatprep.subr.mxu0 0.0
        %414 = vmatpush1.msra.mxu0 0.0
        %415 = vmatprep.subr.mxu0 0.0
        %416 = vmatpush1.msra.mxu0 0.0
        %417 = vmatprep.subr.mxu0 0.0
        %418 = vmatpush1.msra.mxu0 0.0
        %419 = vmatprep.subr.mxu0 0.0
        %420 = vmatpush1.msra.mxu0 0.0
        %421 = vmatprep.subr.mxu0 0.0
        %422 = vmatpush1.msra.mxu0 0.0
        %423 = vmatprep.subr.mxu0 0.0
        %424 = vmatpush1.msra.mxu0 0.0
        %425 = vmatprep.subr.mxu0 0.0
        %426 = vmatpush1.msra.mxu0 0.0
        %427 = vmatprep.subr.mxu0 0.0
        %428 = vmatpush1.msra.mxu0 0.0
        %429 = vmatprep.subr.mxu0 0.0
        %430 = vmatpush1.msra.mxu0 0.0
        %431 = vmatprep.subr.mxu0 0.0
        %432 = vmatpush1.msra.mxu0 0.0
        %433 = vmatprep.subr.mxu0 0.0
        %434 = vmatpush1.msra.mxu0 0.0
        %435 = vmatprep.subr.mxu0 0.0
        %436 = vmatpush1.msra.mxu0 0.0
        %437 = vmatprep.subr.mxu0 0.0
        %438 = vmatpush1.msra.mxu0 0.0
        %439 = vmatprep.subr.mxu0 0.0
        %440 = vmatpush1.msra.mxu0 0.0
        %441 = vmatprep.subr.mxu0 0.0
        %442 = vmatpush1.msra.mxu0 0.0
        %443 = vmatprep.subr.mxu0 0.0
        %444 = vmatpush1.msra.mxu0 0.0
        %445 = vmatprep.subr.mxu0 0.0
        %446 = vmatpush1.msra.mxu0 0.0
        %447 = vmatprep.subr.mxu0 0.0
        %448 = vmatpush1.msra.mxu0 0.0
        %449 = vmatprep.subr.mxu0 0.0
        %450 = vmatpush1.msra.mxu0 0.0
        %451 = vmatprep.subr.mxu0 0.0
        %452 = vmatpush1.msra.mxu0 0.0
        %453 = vmatprep.subr.mxu0 0.0
        %454 = vmatpush1.msra.mxu0 0.0
        %455 = vmatprep.subr.mxu0 0.0
        %456 = vmatpush1.msra.mxu0 0.0
        %457 = vmatprep.subr.mxu0 0.0
        %458 = vmatpush1.msra.mxu0 0.0
        %459 = vmatprep.subr.mxu0 0.0
        %460 = vmatpush1.msra.mxu0 0.0
        %461 = vmatprep.subr.mxu0 0.0
        %462 = vmatpush1.msra.mxu0 0.0
        %463 = vmatprep.subr.mxu0 0.0
        %464 = vmatpush1.msra.mxu0 0.0
        %465 = vmatprep.subr.mxu0 0.0
        %466 = vmatpush1.msra.mxu0 0.0
        %467 = vmatprep.subr.mxu0 0.0
        %468 = vmatpush1.msra.mxu0 0.0
        %469 = vmatprep.subr.mxu0 0.0
        %470 = vmatpush1.msra.mxu0 0.0
        %471 = vmatprep.mubr.f32.mxu0 0.0
        %472 = vmatmul.mubr.f32.gmra.mrb[0].mxu0 %v396
        %v473 = vpop.f32.mrb[0].mxu0
        %v474 = vadd.f32 %v377, %v473
        %v475 = vpop.f32.mrb[0].mxu0
        %476 = vmatprep.mubr.f32.mxu0 0.0
        %477 = vmatmul.mubr.f32.gmra.mrb[0].mxu0 %v399
        %v478 = vpop.f32.mrb[0].mxu0
        %v479 = vadd.f32 %v382, %v478
        %v480 = vpop.f32.mrb[0].mxu0
        %481 = vmatprep.mubr.f32.mxu0 0.0
        %482 = vmatmul.mubr.f32.gmra.mrb[0].mxu0 %v402
        %v483 = vpop.f32.mrb[0].mxu0
        %v484 = vadd.f32 %v387, %v483
        %v485 = vpop.f32.mrb[0].mxu0
        %486 = vmatprep.mubr.f32.mxu0 0.0
        %487 = vmatmul.mubr.f32.gmra.mrb[0].mxu0 %v405
        %v488 = vpop.f32.mrb[0].mxu0
        %v489 = vadd.f32 %v392, %v488
        %v490 = vpop.f32.mrb[0].mxu0
        %491 = vdwg.mxu0
        %vm492 = vcmask 15360
        %v493 = vsel %vm492, %v474, 0.0
        %494 = vadd.xlane.f32.xlu0 %v493
        %v495 = vpop.xlane.xlu0 %494
        %v496 = vsel %vm492, %v479, 0.0
        %497 = vadd.xlane.f32.xlu0 %v496
        %v498 = vpop.xlane.xlu0 %497
        %v499 = vsel %vm492, %v484, 0.0
        %500 = vadd.xlane.f32.xlu0 %v499
        %v501 = vpop.xlane.xlu0 %500
        %v502 = vsel %vm492, %v489, 0.0
        %503 = vadd.xlane.f32.xlu0 %v502
        %v504 = vpop.xlane.xlu0 %503
        %v505 = vxor.u32 %v495, 2147483648
        %v506 = vxor.u32 %v498, 2147483648
        %v507 = vxor.u32 %v501, 2147483648
        %v508 = vxor.u32 %v504, 2147483648
        %v509 = vmul.f32 %v505, 1.442695
        %v510 = vpow.pop %v509
        %v511 = vmul.f32 %v506, 1.442695
        %v512 = vpow.pop %v511
        %v513 = vmul.f32 %v507, 1.442695
        %v514 = vpow.pop %v513
        %v515 = vmul.f32 %v508, 1.442695
        %v516 = vpow.pop %v515
        %v517 = vadd.f32 %v510, 1.0
        %v518 = vadd.f32 %v512, 1.0
        %v519 = vadd.f32 %v514, 1.0
        %v520 = vadd.f32 %v516, 1.0
        %v521 = vrcp.pop %v517
        %v522 = vmul.f32 1.0, %v521
        %v523 = vrcp.pop %v518
        %v524 = vmul.f32 1.0, %v523
        %v525 = vrcp.pop %v519
        %v526 = vmul.f32 1.0, %v525
        %v527 = vrcp.pop %v520
        %v528 = vmul.f32 1.0, %v527
        %v529 = vmul.f32 %v243, %v522
        %v530 = vmul.f32 %v244, %v522
        %v531 = vmul.f32 %v245, %v524
        %v532 = vmul.f32 %v246, %v524
        %v533 = vmul.f32 %v247, %v526
        %v534 = vmul.f32 %v248, %v526
        %v535 = vmul.f32 %v249, %v528
        %v536 = vmul.f32 %v250, %v528
        %537 = vst [vmem:[%s242] sm:$0xff] %v529
        %538 = vst [vmem:[%s242 + $0x8] sm:$0xff] %v530
        %539 = vst [vmem:[%s242 + $0x10] sm:$0xff] %v531
        %540 = vst [vmem:[%s242 + $0x18] sm:$0xff] %v532
        %541 = vst [vmem:[%s242 + $0x20] sm:$0xff] %v533
        %542 = vst [vmem:[%s242 + $0x28] sm:$0xff] %v534
        %543 = vst [vmem:[%s242 + $0x30] sm:$0xff] %v535
        %544 = vst [vmem:[%s242 + $0x38] sm:$0xff] %v536
        %s545 = sand.u32 %s140, 1
        %s546 = scalar_lea.sflag [#allocation4], %s545
        %s547 = sand.u32 %s140, 1
        %s548 = smul.addr %s547, 64
        %s549 = scalar_lea.vmem [#allocation5], %s548
        // Predicated region
        $region45: #{tpu_custom_call.1} parent=39 // pred_check
          %p550 = pneg %p150
        $region46: #{tpu_custom_call.1} parent=39 // pred_check_branch
          %552 = sbr.rel (%p550) target = $region48
        $region47: #{tpu_custom_call.1} parent=39 // pred_region
          %s554 = ssub.s32 1024, 1024
          %555 = vsyncadd %s546, %s554
          %s556 = smul.addr %s22, 8
          %s557 = smul.addr %s556, 128
          %s558 = scalar_lea.hbm %s5, %s557
          %s559 = sshll.u32 %s549, 4
          %s560 = int_to_ptr.vmem [resolvable:$true] %s559
          %565 = dma.vmem_to_hbm [thread:$0]  %s560, 1024, %s558, %s546, 256, 256, 16
        $region48: #{tpu_custom_call.1} parent=39 // pred_fallthru
          _
      $region40: #{tpu_custom_call.1} parent=5 // pred_fallthru
        _
      %p566 = scmp.le.s32.totalorder 2, %s17
      // Predicated region
      $region49: #{tpu_custom_call.1} parent=5 // pred_check
        %p567 = pneg %p566
      $region50: #{tpu_custom_call.1} parent=5 // pred_check_branch
        %569 = sbr.rel (%p567) target = $region52
      $region51: #{tpu_custom_call.1} parent=5 // pred_region
        %s570 = ssub.s32 %s17, 2
        // Predicated region
        $region53: #{tpu_custom_call.1} parent=51 // pred_check
          %p571 = pneg %p156
        $region54: #{tpu_custom_call.1} parent=51 // pred_check_branch
          %573 = sbr.rel (%p571) target = $region56
        $region55: #{tpu_custom_call.1} parent=51 // pred_region
          %s574 = sand.u32 %s141, 1
          %s575 = scalar_lea.sflag [#allocation4], %s574
          %s576 = sand.u32 %s141, 1
          %s577 = smul.addr %s576, 64
          %s578 = scalar_lea.vmem [#allocation5], %s577
          %579 = dma.done %s575, 1024
        $region56: #{tpu_custom_call.1} parent=51 // pred_fallthru
          _
      $region52: #{tpu_custom_call.1} parent=5 // pred_fallthru
        _
    $region6: #{tpu_custom_call.1} parent=1 // loop_footer
      %s21 = sadd.s32 1, %s17
    $region7: #{tpu_custom_call.1} parent=1 // loop_footer_branch
      %16 = sbr.rel target = $region3
    $region8: #{tpu_custom_call.1} parent=1 // loop_exit
      _
    %580 = vsyncpa [#allocation3], 1
    %s581 = scalar_lea.sflag [#allocation3], 1
    %582 = vsyncpa %s581, 1
    %583 = vsyncpa [#allocation4], 1
    %s584 = scalar_lea.sflag [#allocation4], 1
    %585 = vsyncpa %s584, 1

</llo_original>
